<compile_context>
chip_gen: v6e
topology: v6e:2x2x1
jax: 0.10.0
libtpu: 0.0.40
codegen_flags: <defaults>
</compile_context>

<pallas_src>
import functools

import jax
import jax.numpy as jnp
from jax.experimental import pallas as pl
from jax.experimental.pallas import tpu as pltpu


def _round_up(n, m):
    return ((n + m - 1) // m) * m


def _disc_kernel(seed_ref, x_ref, w1_ref, b1_ref, w2_ref, b2_ref, o_ref, *, p):
    # Hidden layer: bf16 operands on the MXU, f32 accumulation; bias + ReLU on the VPU.
    x = x_ref[...].astype(jnp.bfloat16)
    w1 = w1_ref[...].astype(jnp.bfloat16)
    h = jnp.dot(x, w1, preferred_element_type=jnp.float32) + b1_ref[...]
    h = jnp.maximum(h, 0.0)

    w2 = w2_ref[...]  # (1, H) f32, broadcast against h below

    # Inverted dropout (training mode), integer-domain masking.
    # TODO(synk): torch's dropout RNG stream is not reproducible bit-for-bit; we use a
    # counter-based hash so masks are i.i.d. and distinct across batch tiles.
    if p > 0.0:
        tb, hdim = h.shape
        row = jax.lax.broadcasted_iota(jnp.int32, h.shape, 0)
        col = jax.lax.broadcasted_iota(jnp.int32, h.shape, 1)
        grow = pl.program_id(0) * tb + row                  # global batch row
        ctr = (grow * hdim + col).astype(jnp.uint32)        # unique per hidden element
        key = seed_ref[0].astype(jnp.uint32)
        bits = ctr + key * jnp.uint32(0x9E3779B9)
        bits ^= bits >> 16                                  # murmur3 fmix32
        bits *= jnp.uint32(0x85EBCA6B)
        bits ^= bits >> 13
        bits *= jnp.uint32(0xC2B2AE35)
        bits ^= bits >> 16
        thresh = jnp.uint32(min(int(p * 4294967296.0), 4294967295))
        keep = bits >= thresh                               # P(keep) = 1 - p
        h = jnp.where(keep, h, 0.0)
        # Fold the 1/(1-p) rescale into the (1, H) output row: H muls instead of tb*H.
        w2 = w2 * jnp.float32(1.0 / (1.0 - p))

    # Output layer: out_features == 1 -> lane reduction instead of an N=1 MXU matmul.
    out = jnp.sum(h * w2, axis=-1, keepdims=True) + b2_ref[0]
    o_ref[...] = out.astype(o_ref.dtype)


def discriminator_forward(x, params, *, seed, dropout, training=True, block_b=512):
    """x: (B, n_fts) float32. params = (w1, b1, w2_row, b2) in kernel layout."""
    w1, b1, w2, b2 = params
    B, F = x.shape
    H = w1.shape[1]
    p = float(dropout) if training else 0.0

    # Batch tiling: tile size is a multiple of 8 (f32 sublanes); pad B if needed.
    # Cap the tile so a double-buffered x tile stays ~<= 4 MiB (default VMEM budget).
    max_tb = max(8, ((4 << 20) // max(1, F * 4)) // 8 * 8)
    tb = max(8, min(int(block_b), max_tb, _round_up(B, 8)))
    Bp = _round_up(B, tb)
    xp = jnp.pad(x, ((0, Bp - B), (0, 0))) if Bp != B else x
    nb = Bp // tb

    kernel = functools.partial(_disc_kernel, p=p)
    seed_arr = jnp.asarray([seed], dtype=jnp.int32)

    out = pl.pallas_call(
        kernel,
        out_shape=jax.ShapeDtypeStruct((Bp, 1), x.dtype),
        grid_spec=pltpu.PrefetchScalarGridSpec(
            num_scalar_prefetch=1,                            # dropout seed -> SMEM
            grid=(nb,),
            in_specs=[
                pl.BlockSpec((tb, F), lambda i, s: (i, 0)),   # x (tiled over batch)
                pl.BlockSpec((F, H), lambda i, s: (0, 0)),    # W1 (VMEM-resident)
                pl.BlockSpec((1, H), lambda i, s: (0, 0)),    # b1 (VMEM-resident)
                pl.BlockSpec((1, H), lambda i, s: (0, 0)),    # W2 row (VMEM-resident)
                pl.BlockSpec(memory_space=pltpu.MemorySpace.SMEM),  # b2 scalar
            ],
            out_specs=pl.BlockSpec((tb, 1), lambda i, s: (i, 0)),
        ),
        compiler_params=pltpu.CompilerParams(
            dimension_semantics=("parallel",)),               # shard batch blocks (v7x 2 TCs)
    )(seed_arr, xp, w1, b1, w2, b2)

    return out[:B] if Bp != B else out


def init_discriminator_params(key, n_fts):
    """Deterministic init mirroring nn.Linear default (uniform +-1/sqrt(fan_in))."""
    hidden = n_fts // 2
    k1, k2, k3, k4 = jax.random.split(key, 4)
    bound1 = float(n_fts) ** -0.5
    bound2 = float(hidden) ** -0.5
    w1 = jax.random.uniform(k1, (n_fts, hidden), jnp.float32, -bound1, bound1)
    b1 = jax.random.uniform(k2, (1, hidden), jnp.float32, -bound1, bound1)
    w2 = jax.random.uniform(k3, (1, hidden), jnp.float32, -bound2, bound2)  # row layout
    b2 = jax.random.uniform(k4, (1,), jnp.float32, -bound2, bound2)
    return w1, b1, w2, b2


if __name__ == "__main__":
    key = jax.random.PRNGKey(0)
    B, n_fts = 8, 32          # small shapes consistent with the module
    dropout = 0.5

    pkey, xkey = jax.random.split(key)
    params = init_discriminator_params(pkey, n_fts)
    x = jax.random.normal(xkey, (B, n_fts), jnp.float32)

    out = discriminator_forward(x, params, seed=0, dropout=dropout, training=True)
    jax.block_until_ready(out)
    assert out.shape == (B, 1) and out.dtype == jnp.float32

    # Eval-mode path (p = 0) exercises the no-dropout specialization as well.
    out_eval = discriminator_forward(x, params, seed=0, dropout=dropout, training=False)
    jax.block_until_ready(out_eval)
    assert out_eval.shape == (B, 1)

    print("KERNEL_OK")
</pallas_src>

<mosaic_0001>
module attributes {stable_mosaic.version = 11 : i64} {
  func.func @_disc_kernel(%arg0: i32, %arg1: memref<1xi32, #tpu.memory_space<smem>>, %arg2: memref<8x32xf32, #tpu.memory_space<vmem>>, %arg3: memref<32x16xf32, #tpu.memory_space<vmem>>, %arg4: memref<1x16xf32, #tpu.memory_space<vmem>>, %arg5: memref<1x16xf32, #tpu.memory_space<vmem>>, %arg6: memref<1xf32, #tpu.memory_space<smem>>, %arg7: memref<8x1xf32, #tpu.memory_space<vmem>>) attributes {dimension_semantics = [#tpu.dimension_semantics<parallel>], iteration_bounds = array<i64: 1>, scalar_prefetch = 1 : i64, scratch_operands = 0 : i64, tpu.core_type = #tpu.core_type<tc>, window_params = [{transform_indices = @transform_0, window_bounds = array<i64: 8, 32>}, {pipeline_mode = #tpu.pipeline_mode<synchronous>, transform_indices = @transform_1, window_bounds = array<i64: 32, 16>}, {pipeline_mode = #tpu.pipeline_mode<synchronous>, transform_indices = @transform_2, window_bounds = array<i64: 1, 16>}, {pipeline_mode = #tpu.pipeline_mode<synchronous>, transform_indices = @transform_3, window_bounds = array<i64: 1, 16>}, {transform_indices = @transform_4, window_bounds = array<i64: 1>}, {transform_indices = @transform_5, window_bounds = array<i64: 8, 1>}]} {
    %c0 = arith.constant 0 : index
    %c0_0 = arith.constant 0 : index
    %0 = vector.load %arg2[%c0, %c0_0] : memref<8x32xf32, #tpu.memory_space<vmem>>, vector<8x32xf32>
    %1 = arith.truncf %0 : vector<8x32xf32> to vector<8x32xbf16>
    %c0_1 = arith.constant 0 : index
    %c0_2 = arith.constant 0 : index
    %2 = vector.load %arg3[%c0_1, %c0_2] : memref<32x16xf32, #tpu.memory_space<vmem>>, vector<32x16xf32>
    %3 = arith.truncf %2 : vector<32x16xf32> to vector<32x16xbf16>
    %cst = arith.constant dense<0.000000e+00> : vector<8x16xf32>
    %4 = tpu.matmul %1, %3, %cst {dimension_numbers = #tpu.dot_dimension_numbers<[1], [0], [0], [1], [0, 0, 1, 1], [], []>} : vector<8x32xbf16>, vector<32x16xbf16>, vector<8x16xf32> -> vector<8x16xf32>
    %c0_3 = arith.constant 0 : index
    %c0_4 = arith.constant 0 : index
    %5 = vector.load %arg4[%c0_3, %c0_4] : memref<1x16xf32, #tpu.memory_space<vmem>>, vector<1x16xf32>
    %6 = vector.broadcast %5 : vector<1x16xf32> to vector<8x16xf32>
    %7 = arith.addf %4, %6 : vector<8x16xf32>
    %cst_5 = arith.constant 0.000000e+00 : f32
    %8 = vector.broadcast %cst_5 : f32 to vector<8x16xf32>
    %9 = arith.maximumf %7, %8 : vector<8x16xf32>
    %c0_6 = arith.constant 0 : index
    %c0_7 = arith.constant 0 : index
    %10 = vector.load %arg5[%c0_6, %c0_7] : memref<1x16xf32, #tpu.memory_space<vmem>>, vector<1x16xf32>
    %11 = tpu.iota {dimensions = array<i32: 0>} : vector<8x16xi32>
    %12 = tpu.iota {dimensions = array<i32: 1>} : vector<8x16xi32>
    %c8_i32 = arith.constant 8 : i32
    %13 = arith.muli %arg0, %c8_i32 : i32
    %14 = vector.broadcast %13 : i32 to vector<8x16xi32>
    %15 = arith.addi %14, %11 : vector<8x16xi32>
    %c16_i32 = arith.constant 16 : i32
    %16 = vector.broadcast %c16_i32 : i32 to vector<8x16xi32>
    %17 = arith.muli %15, %16 : vector<8x16xi32>
    %18 = arith.addi %17, %12 : vector<8x16xi32>
    %c0_8 = arith.constant 0 : index
    %19 = memref.load %arg1[%c0_8] : memref<1xi32, #tpu.memory_space<smem>>
    %c-1640531527_i32 = arith.constant -1640531527 : i32
    %20 = arith.muli %19, %c-1640531527_i32 : i32
    %21 = vector.broadcast %20 : i32 to vector<8x16xi32>
    %22 = arith.addi %18, %21 : vector<8x16xi32>
    %c16_i32_9 = arith.constant 16 : i32
    %23 = vector.broadcast %c16_i32_9 : i32 to vector<8x16xi32>
    %24 = arith.shrui %22, %23 : vector<8x16xi32>
    %25 = arith.xori %22, %24 : vector<8x16xi32>
    %c-2048144789_i32 = arith.constant -2048144789 : i32
    %26 = vector.broadcast %c-2048144789_i32 : i32 to vector<8x16xi32>
    %27 = arith.muli %25, %26 : vector<8x16xi32>
    %c13_i32 = arith.constant 13 : i32
    %28 = vector.broadcast %c13_i32 : i32 to vector<8x16xi32>
    %29 = arith.shrui %27, %28 : vector<8x16xi32>
    %30 = arith.xori %27, %29 : vector<8x16xi32>
    %c-1028477387_i32 = arith.constant -1028477387 : i32
    %31 = vector.broadcast %c-1028477387_i32 : i32 to vector<8x16xi32>
    %32 = arith.muli %30, %31 : vector<8x16xi32>
    %c16_i32_10 = arith.constant 16 : i32
    %33 = vector.broadcast %c16_i32_10 : i32 to vector<8x16xi32>
    %34 = arith.shrui %32, %33 : vector<8x16xi32>
    %35 = arith.xori %32, %34 : vector<8x16xi32>
    %c-2147483648_i32 = arith.constant -2147483648 : i32
    %36 = vector.broadcast %c-2147483648_i32 : i32 to vector<8x16xi32>
    %37 = arith.cmpi uge, %35, %36 : vector<8x16xi32>
    %cst_11 = arith.constant 0.000000e+00 : f32
    %38 = vector.broadcast %cst_11 : f32 to vector<8x16xf32>
    %39 = arith.select %37, %9, %38 : vector<8x16xi1>, vector<8x16xf32>
    %cst_12 = arith.constant 2.000000e+00 : f32
    %40 = vector.broadcast %cst_12 : f32 to vector<1x16xf32>
    %41 = arith.mulf %10, %40 : vector<1x16xf32>
    %42 = vector.broadcast %41 : vector<1x16xf32> to vector<8x16xf32>
    %43 = arith.mulf %39, %42 : vector<8x16xf32>
    %cst_13 = arith.constant dense<0.000000e+00> : vector<8xf32>
    %44 = vector.multi_reduction <add>, %43, %cst_13 [1] : vector<8x16xf32> to vector<8xf32>
    %45 = vector.shape_cast %44 : vector<8xf32> to vector<8x1xf32>
    %c0_14 = arith.constant 0 : index
    %46 = memref.load %arg6[%c0_14] : memref<1xf32, #tpu.memory_space<smem>>
    %47 = vector.broadcast %46 : f32 to vector<8x1xf32>
    %48 = arith.addf %45, %47 : vector<8x1xf32>
    %c0_15 = arith.constant 0 : index
    %c0_16 = arith.constant 0 : index
    %49 = vector.load %arg7[%c0_15, %c0_16] : memref<8x1xf32, #tpu.memory_space<vmem>>, vector<8x1xf32>
    tpu.vector_store %arg7[%c0_15, %c0_16], %48 {strides = array<i32>} : memref<8x1xf32, #tpu.memory_space<vmem>>, vector<8x1xf32>,
    return
  }
  func.func @transform_0(%arg0: i32, %arg1: memref<1xi32, #tpu.memory_space<smem>>) -> (i32, i32) {
    %c0_i32 = arith.constant 0 : i32
    %c0_i32_0 = arith.constant 0 : i32
    return %arg0, %c0_i32 : i32, i32
  }
  func.func @transform_1(%arg0: i32, %arg1: memref<1xi32, #tpu.memory_space<smem>>) -> (i32, i32) {
    %c0_i32 = arith.constant 0 : i32
    %c0_i32_0 = arith.constant 0 : i32
    %c0_i32_1 = arith.constant 0 : i32
    return %c0_i32, %c0_i32_0 : i32, i32
  }
  func.func @transform_2(%arg0: i32, %arg1: memref<1xi32, #tpu.memory_space<smem>>) -> (i32, i32) {
    %c0_i32 = arith.constant 0 : i32
    %c0_i32_0 = arith.constant 0 : i32
    %c0_i32_1 = arith.constant 0 : i32
    return %c0_i32, %c0_i32_0 : i32, i32
  }
  func.func @transform_3(%arg0: i32, %arg1: memref<1xi32, #tpu.memory_space<smem>>) -> (i32, i32) {
    %c0_i32 = arith.constant 0 : i32
    %c0_i32_0 = arith.constant 0 : i32
    %c0_i32_1 = arith.constant 0 : i32
    return %c0_i32, %c0_i32_0 : i32, i32
  }
  func.func @transform_4(%arg0: i32, %arg1: memref<1xi32, #tpu.memory_space<smem>>) -> i32 {
    %c0_i32 = arith.constant 0 : i32
    %c0_i32_0 = arith.constant 0 : i32
    return %c0_i32 : i32
  }
  func.func @transform_5(%arg0: i32, %arg1: memref<1xi32, #tpu.memory_space<smem>>) -> (i32, i32) {
    %c0_i32 = arith.constant 0 : i32
    %c0_i32_0 = arith.constant 0 : i32
    return %arg0, %c0_i32 : i32, i32
  }
}

</mosaic_0001>

<llo_original>
// kernel: tpu_custom_call.1
$region0: #{tpu_custom_call.1}
  #allocation0 [shape = 'u32[]', space=smem, size = 0x4, offset = 0x4, fixed_abs, tag = 'smem constant byte address 0x4 - core index']
  #allocation1 [shape = 'u32[144,128]{1,0:T(1,128)}', space=vmem, size = 0x12000, scoped, tag = 'internal scratch']
  #allocation2 [shape = 's32[1]{0}', space=sflag, size = 0x4, scoped, tag = 'scoped memory for tpu_custom_call.1']
  #allocation3 [shape = 's32[1]{0:T(128)S(6)}', space=smem, size = 0x200, scoped, tag = 'prefetched SMEM operand 0']
  #allocation4 [shape = 'f32[1]{0:T(128)S(6)}', space=smem, size = 0x200, scoped, tag = 'scoped memory for tpu_custom_call.1']
  %s0 = inlined_call_operand.<no memory space> [shape: s32[1], index: 0, kind: input, shape index: {}]
  %s1 = inlined_call_operand.vmem [shape: f32[8,32], index: 1, kind: input, shape index: {}]
  %s2 = inlined_call_operand.vmem [shape: f32[32,16], index: 2, kind: input, shape index: {}]
  %s3 = inlined_call_operand.vmem [shape: f32[1,16], index: 3, kind: input, shape index: {}]
  %s4 = inlined_call_operand.vmem [shape: f32[1,16], index: 4, kind: input, shape index: {}]
  %s5 = inlined_call_operand.<no memory space> [shape: f32[1], index: 5, kind: input, shape index: {}]
  %s6 = inlined_call_operand.vmem [shape: f32[8,1], index: 6, kind: output, shape index: {}]
  %s7 = sld [smem:[#allocation0]]
  $region30: #{tpu_custom_call.1} parent=0
    _
  %s9 = ssub.s32 1, %s7
  %s10 = scalar_select 0, %s9, %s7
  %11 = sst [smem:[#allocation3]] %s0
  %12 = sst [smem:[#allocation4]] %s5
  // Predicated region
  $region2: #{tpu_custom_call.1} parent=0 // pred_check
    _
  $region3: #{tpu_custom_call.1} parent=0 // pred_check_branch
    %14 = sbr.rel (0) target = $region5
  $region4: #{tpu_custom_call.1} parent=0 // pred_region
    _
  $region5: #{tpu_custom_call.1} parent=0 // pred_fallthru
    _
  // Predicated region
  $region6: #{tpu_custom_call.1} parent=0 // pred_check
    _
  $region7: #{tpu_custom_call.1} parent=0 // pred_check_branch
    %16 = sbr.rel (0) target = $region9
  $region8: #{tpu_custom_call.1} parent=0 // pred_region
    _
  $region9: #{tpu_custom_call.1} parent=0 // pred_fallthru
    _
  // Predicated region
  $region10: #{tpu_custom_call.1} parent=0 // pred_check
    _
  $region11: #{tpu_custom_call.1} parent=0 // pred_check_branch
    %18 = sbr.rel (0) target = $region13
  $region12: #{tpu_custom_call.1} parent=0 // pred_region
    _
  $region13: #{tpu_custom_call.1} parent=0 // pred_fallthru
    _
  // Predicated region
  $region14: #{tpu_custom_call.1} parent=0 // pred_check
    _
  $region15: #{tpu_custom_call.1} parent=0 // pred_check_branch
    %20 = sbr.rel (0) target = $region17
  $region16: #{tpu_custom_call.1} parent=0 // pred_region
    _
  $region17: #{tpu_custom_call.1} parent=0 // pred_fallthru
    _
  // Predicated region
  $region18: #{tpu_custom_call.1} parent=0 // pred_check
    _
  $region19: #{tpu_custom_call.1} parent=0 // pred_check_branch
    %22 = sbr.rel (0) target = $region21
  $region20: #{tpu_custom_call.1} parent=0 // pred_region
    _
  $region21: #{tpu_custom_call.1} parent=0 // pred_fallthru
    _
  %v24 = vld [vmem:[%s1] sm:$0xff]
  %v25 = vpack.c.bf16 %v24, %v24
  %v26 = vld [vmem:[%s2] sm:$0xff]
  %v27 = vld [vmem:[%s2 + $0x8] sm:$0xff]
  %v28 = vld [vmem:[%s2 + $0x10] sm:$0xff]
  %v29 = vld [vmem:[%s2 + $0x18] sm:$0xff]
  %v30 = vpack.c.bf16 %v27, %v26
  %v31 = vpack.c.bf16 %v29, %v28
  %v32 = vld [vmem:[%s3] sm:$0x1]
  %v34 = vlaneseq
  %v35 = vshrl.u32 %v34, 7
  %v36 = vsub.s32 0, %v35
  %v37 = vrot.slane %v32, %v36
  %vm39 = vcmask 261120
  %v41 = vsel %vm39, %v25, 0
  %43 = vmatprep.subr.bf16.mxu0 0
  %44 = vmatpush1.bf16.msra.mxu0 0
  %45 = vmatprep.subr.bf16.mxu0 0
  %46 = vmatpush1.bf16.msra.mxu0 0
  %47 = vmatprep.subr.bf16.mxu0 0
  %48 = vmatpush1.bf16.msra.mxu0 0
  %49 = vmatprep.subr.bf16.mxu0 0
  %50 = vmatpush1.bf16.msra.mxu0 0
  %51 = vmatprep.subr.bf16.mxu0 0
  %52 = vmatpush1.bf16.msra.mxu0 0
  %53 = vmatprep.subr.bf16.mxu0 0
  %54 = vmatpush1.bf16.msra.mxu0 0
  %55 = vmatprep.subr.bf16.mxu0 0
  %56 = vmatpush1.bf16.msra.mxu0 %v31
  %57 = vmatprep.subr.bf16.mxu0 0
  %58 = vmatpush1.bf16.msra.mxu0 %v30
  %59 = vmatprep.subr.bf16.mxu0 0
  %60 = vmatpush2.bf16.msra.mxu0 0
  %61 = vmatprep.subr.bf16.mxu0 0
  %62 = vmatpush2.bf16.msra.mxu0 0
  %63 = vmatprep.subr.bf16.mxu0 0
  %64 = vmatpush2.bf16.msra.mxu0 0
  %65 = vmatprep.subr.bf16.mxu0 0
  %66 = vmatpush2.bf16.msra.mxu0 0
  %67 = vmatprep.subr.bf16.mxu0 0
  %68 = vmatpush2.bf16.msra.mxu0 0
  %69 = vmatprep.subr.bf16.mxu0 0
  %70 = vmatpush2.bf16.msra.mxu0 0
  %71 = vmatprep.subr.bf16.mxu0 0
  %72 = vmatpush2.bf16.msra.mxu0 0
  %73 = vmatprep.subr.bf16.mxu0 0
  %74 = vmatpush2.bf16.msra.mxu0 0
  %75 = vmatprep.mubr.bf16.mxu0 0
  %76 = vmatmul.mubr.bf16.gmra.mxu0 %v41
  %v77 = vpop.f32.mrf.mxu0
  %v78 = vadd.f32 %v37, %v77
  %v79 = vpop.f32.mrf.mxu0
  %v80 = vpop.f32.mrf.mxu0
  %v81 = vpop.f32.mrf.mxu0
  %82 = vdwg.mxu0
  %v83 = vmax.f32 %v78, 0.0
  %v84 = vld [vmem:[%s4] sm:$0x1]
  %v85 = vlaneseq
  %v86 = vshrl.u32 %v85, 7
  %v87 = vlaneseq
  %v88 = vand.u32 %v87, 127
  %s89 = smul.u32 0, 8
  %v90 = vstv %s89
  %v91 = vadd.s32 %v90, %v86
  %v92 = vmul.u32 %v91, 16
  %v93 = vadd.s32 %v92, %v88
  %s94 = sld [smem:[#allocation3]]
  %s95 = smul.u32 %s94, 2654435769
  %v96 = vstv %s95
  %v97 = vadd.s32 %v93, %v96
  %v98 = vshrl.u32 %v97, 16
  %v99 = vxor.u32 %v97, %v98
  %v100 = vmul.u32 %v99, 2246822507
  %v101 = vshrl.u32 %v100, 13
  %v102 = vxor.u32 %v100, %v101
  %v103 = vmul.u32 %v102, 3266489909
  %v104 = vshrl.u32 %v103, 16
  %v105 = vxor.u32 %v103, %v104
  %vm106 = vcmp.ge.u32.totalorder %v105, 2147483648
  %v107 = vsel %vm106, %v83, 0.0
  %v108 = vmul.f32 %v84, 2.0
  %v110 = vlaneseq
  %v111 = vshrl.u32 %v110, 7
  %v112 = vsub.s32 0, %v111
  %v113 = vrot.slane %v108, %v112
  %v115 = vmul.f32 %v107, %v113
  %vm116 = vcmask 130048
  %v117 = vsel %vm116, %v115, 0.0
  %118 = vadd.xlane.f32.xlu0 %v117
  %v119 = vpop.xlane.xlu0 %118
  %s120 = sld [smem:[#allocation4]]
  %v121 = vstv %s120
  %v122 = vadd.f32 %v119, %v121
  %vm123 = vcmask 7168
  %124 = vst.msk [vmem:[%s6] sm:$0xff] %vm123, %v122
  // Predicated region
  $region22: #{tpu_custom_call.1} parent=0 // pred_check
    _
  $region23: #{tpu_custom_call.1} parent=0 // pred_check_branch
    %126 = sbr.rel (0) target = $region25
  $region24: #{tpu_custom_call.1} parent=0 // pred_region
    _
  $region25: #{tpu_custom_call.1} parent=0 // pred_fallthru
    _
  // Predicated region
  $region26: #{tpu_custom_call.1} parent=0 // pred_check
    _
  $region27: #{tpu_custom_call.1} parent=0 // pred_check_branch
    %128 = sbr.rel (0) target = $region29
  $region28: #{tpu_custom_call.1} parent=0 // pred_region
    _
  $region29: #{tpu_custom_call.1} parent=0 // pred_fallthru
    _

</llo_original>
